<compile_context>
chip_gen: v7x
topology: tpu7x:2x2x1
jax: 0.10.0
libtpu: 0.0.40
codegen_flags: <defaults>
</compile_context>

<pallas_src>
import jax
import jax.numpy as jnp
from jax.experimental import pallas as pl
from jax.experimental.pallas import tpu as pltpu

REPARAM_NOISE = 1e-6
HEAD_PAD = 128   # lane-dense padded width of the fused mu||sigma head
BIAS_ROWS = 8    # bias pack rows (padded to a full sublane tile)


def _round_up(x, m):
    return (x + m - 1) // m * m


def _pick_tm(batch):
    """Batch (M) tile size: sublane-rounded for tiny batches; for larger
    batches grow toward 256/512-row MXU-friendly tiles while keeping >= 2
    grid steps (so both v7x TensorCores share the 'parallel' batch axis)."""
    if batch <= 128:
        return _round_up(max(batch, 1), 8)
    return min(512, _round_up(pl.cdiv(batch, 2), 8))


def _actor_kernel(x_ref, w1_ref, w2_ref, wh_ref, b_ref, out_ref):
    d1 = w1_ref.shape[1]
    d2 = w2_ref.shape[1]
    dh = wh_ref.shape[1]

    bias = b_ref[...]                 # (BIAS_ROWS, width) f32, VMEM resident
    b1 = bias[0:1, :d1]               # (1, 256)
    b2 = bias[1:2, :d2]               # (1, 256)
    bh = bias[2:3, :dh]               # (1, HEAD_PAD)
    sig_mask = bias[3:4, :dh]         # (1, HEAD_PAD) 1.0 on sigma columns

    # fc1 + relu  (bf16 MXU matmul, f32 accumulate, VPU max)
    x = x_ref[...].astype(jnp.bfloat16)
    h1 = jnp.dot(x, w1_ref[...], preferred_element_type=jnp.float32)
    h1 = jnp.maximum(h1 + b1, 0.0)
    # fc2 + relu
    h2 = jnp.dot(h1.astype(jnp.bfloat16), w2_ref[...],
                 preferred_element_type=jnp.float32)
    h2 = jnp.maximum(h2 + b2, 0.0)
    # fused heads: columns [0, n) = mu, [n, 2n) = sigma, rest zero padding.
    head = jnp.dot(h2.astype(jnp.bfloat16), wh_ref[...],
                   preferred_element_type=jnp.float32) + bh
    # clamp only the sigma columns (precomputed mask row -> single select).
    head = jnp.where(sig_mask != 0.0,
                     jnp.clip(head, REPARAM_NOISE, 1.0), head)
    out_ref[...] = head.astype(out_ref.dtype)


def actor_forward(state, packed_params, n_actions):
    """Runs the fused ActorNetwork forward pass. Returns (mu, sigma)."""
    w1, w2, w_head, bias_pack = packed_params
    B, in_dim = state.shape
    d1 = w1.shape[1]
    d2 = w2.shape[1]
    dh = w_head.shape[1]
    bw = bias_pack.shape[1]

    TM = _pick_tm(B)
    B_pad = _round_up(B, TM)
    if B_pad != B:
        state = jnp.pad(state, ((0, B_pad - B), (0, 0)))
    grid = (B_pad // TM,)

    flops = 2 * B_pad * (in_dim * d1 + d1 * d2 + d2 * dh)
    bytes_accessed = (4 * B_pad * in_dim                       # f32 state
                      + 2 * (in_dim * d1 + d1 * d2 + d2 * dh)  # bf16 weights
                      + 4 * bias_pack.size                     # f32 biases
                      + 4 * B_pad * dh)                        # f32 output

    out = pl.pallas_call(
        _actor_kernel,
        out_shape=jax.ShapeDtypeStruct((B_pad, dh), jnp.float32),
        grid=grid,
        in_specs=[
            pl.BlockSpec((TM, in_dim), lambda i: (i, 0)),        # state tile
            pl.BlockSpec((in_dim, d1), lambda i: (0, 0)),        # W1 (resident)
            pl.BlockSpec((d1, d2), lambda i: (0, 0)),            # W2 (resident)
            pl.BlockSpec((d2, dh), lambda i: (0, 0)),            # fused head W
            pl.BlockSpec((BIAS_ROWS, bw), lambda i: (0, 0)),     # biases + mask
        ],
        out_specs=pl.BlockSpec((TM, dh), lambda i: (i, 0)),
        compiler_params=pltpu.CompilerParams(
            dimension_semantics=("parallel",)),
        cost_estimate=pl.CostEstimate(flops=flops, transcendentals=0,
                                      bytes_accessed=bytes_accessed),
    )(state, w1, w2, w_head, bias_pack)

    mu = out[:B, :n_actions]
    sigma = out[:B, n_actions:2 * n_actions]
    return mu, sigma


def init_actor_params(key, input_dims, fc1_dims=256, fc2_dims=256, n_actions=2):
    """Deterministic synthetic init mirroring nn.Linear shapes ([in, out])."""
    ks = jax.random.split(key, 8)

    def uni(k, shape, fan_in):
        bound = 1.0 / jnp.sqrt(jnp.float32(fan_in))
        return jax.random.uniform(k, shape, jnp.float32, -bound, bound)

    w1 = uni(ks[0], (input_dims, fc1_dims), input_dims)
    b1 = uni(ks[1], (fc1_dims,), input_dims)
    w2 = uni(ks[2], (fc1_dims, fc2_dims), fc1_dims)
    b2 = uni(ks[3], (fc2_dims,), fc1_dims)
    wmu = uni(ks[4], (fc2_dims, n_actions), fc2_dims)
    bmu = uni(ks[5], (n_actions,), fc2_dims)
    wsig = uni(ks[6], (fc2_dims, n_actions), fc2_dims)
    bsig = uni(ks[7], (n_actions,), fc2_dims)
    return (w1, b1, w2, b2, wmu, bmu, wsig, bsig)


def pack_actor_params(raw_params, head_pad=HEAD_PAD, weight_dtype=jnp.bfloat16):
    """Fuse mu/sigma heads (zero-padded to lane width), cast weights to bf16,
    and pack all biases + the sigma-column mask into one (8, 256) f32 tile."""
    w1, b1, w2, b2, wmu, bmu, wsig, bsig = raw_params
    fc1 = w1.shape[1]
    fc2 = w2.shape[1]
    n_actions = wmu.shape[1]
    assert 2 * n_actions <= head_pad

    w_head = jnp.zeros((fc2, head_pad), jnp.float32)
    w_head = w_head.at[:, :n_actions].set(wmu)
    w_head = w_head.at[:, n_actions:2 * n_actions].set(wsig)

    bw = max(fc1, fc2, head_pad)
    bias_pack = jnp.zeros((BIAS_ROWS, bw), jnp.float32)
    bias_pack = bias_pack.at[0, :fc1].set(b1)
    bias_pack = bias_pack.at[1, :fc2].set(b2)
    bias_pack = bias_pack.at[2, :n_actions].set(bmu)
    bias_pack = bias_pack.at[2, n_actions:2 * n_actions].set(bsig)
    # Row 3: precomputed 0/1 sigma-column mask (replaces per-step iota+cmp).
    bias_pack = bias_pack.at[3, n_actions:2 * n_actions].set(1.0)

    return (w1.astype(weight_dtype), w2.astype(weight_dtype),
            w_head.astype(weight_dtype), bias_pack), n_actions


def actor_forward_ref(state, raw_params):
    """Pure-JAX f32 reference (matches the PyTorch forward)."""
    w1, b1, w2, b2, wmu, bmu, wsig, bsig = raw_params
    h1 = jnp.maximum(state @ w1 + b1, 0.0)
    h2 = jnp.maximum(h1 @ w2 + b2, 0.0)
    mu = h2 @ wmu + bmu
    sigma = jnp.clip(h2 @ wsig + bsig, REPARAM_NOISE, 1.0)
    return mu, sigma


if __name__ == "__main__":
    batch = 8
    input_dims = 16
    n_actions = 2

    key = jax.random.PRNGKey(0)
    k_state, k_params, k_state2 = jax.random.split(key, 3)

    state = jax.random.normal(k_state, (batch, input_dims), jnp.float32)
    raw = init_actor_params(k_params, input_dims, 256, 256, n_actions)
    packed, n_act = pack_actor_params(raw)

    mu, sigma = actor_forward(state, packed, n_act)
    jax.block_until_ready((mu, sigma))

    mu_ref, sigma_ref = actor_forward_ref(state, raw)
    assert mu.shape == (batch, n_actions) and sigma.shape == (batch, n_actions)
    # bf16 weights with f32 accumulation drift ~1e-3 vs the exact f32 ref.
    assert jnp.allclose(mu, mu_ref, atol=2e-2, rtol=2e-2)
    assert jnp.allclose(sigma, sigma_ref, atol=2e-2, rtol=2e-2)
    # Clamp bounds: float32(1e-6) is slightly below the Python double 1e-6.
    assert float(jnp.min(sigma)) >= REPARAM_NOISE - 1e-9
    assert float(jnp.max(sigma)) <= 1.0 + 1e-9

    # Second check: multi-tile batch grid (B=260 -> TM=136, 2 "parallel"
    # grid steps) plus row padding (272 rows padded, sliced off in wrapper).
    big_state = jax.random.normal(k_state2, (260, input_dims), jnp.float32)
    mu_b, sigma_b = actor_forward(big_state, packed, n_act)
    jax.block_until_ready((mu_b, sigma_b))
    mu_b_ref, sigma_b_ref = actor_forward_ref(big_state, raw)
    assert mu_b.shape == (260, n_actions) and sigma_b.shape == (260, n_actions)
    assert jnp.allclose(mu_b, mu_b_ref, atol=2e-2, rtol=2e-2)
    assert jnp.allclose(sigma_b, sigma_b_ref, atol=2e-2, rtol=2e-2)
    assert float(jnp.min(sigma_b)) >= REPARAM_NOISE - 1e-9
    assert float(jnp.max(sigma_b)) <= 1.0 + 1e-9

    # TODO(synk): sample_normal (Normal rsample / tanh squash / log_prob) is a
    # stochastic host-level method and is intentionally left outside the kernel.
    print("KERNEL_OK")
</pallas_src>

<mosaic_0001>
module attributes {stable_mosaic.version = 11 : i64} {
  func.func @_actor_kernel(%arg0: i32, %arg1: memref<8x16xf32, #tpu.memory_space<vmem>>, %arg2: memref<16x256xbf16, #tpu.memory_space<vmem>>, %arg3: memref<256x256xbf16, #tpu.memory_space<vmem>>, %arg4: memref<256x128xbf16, #tpu.memory_space<vmem>>, %arg5: memref<8x256xf32, #tpu.memory_space<vmem>>, %arg6: memref<8x128xf32, #tpu.memory_space<vmem>>) attributes {dimension_semantics = [#tpu.dimension_semantics<parallel>], iteration_bounds = array<i64: 1>, scalar_prefetch = 0 : i64, scratch_operands = 0 : i64, tpu.core_type = #tpu.core_type<tc>, window_params = [{transform_indices = @transform_0, window_bounds = array<i64: 8, 16>}, {pipeline_mode = #tpu.pipeline_mode<synchronous>, transform_indices = @transform_1, window_bounds = array<i64: 16, 256>}, {pipeline_mode = #tpu.pipeline_mode<synchronous>, transform_indices = @transform_2, window_bounds = array<i64: 256, 256>}, {pipeline_mode = #tpu.pipeline_mode<synchronous>, transform_indices = @transform_3, window_bounds = array<i64: 256, 128>}, {pipeline_mode = #tpu.pipeline_mode<synchronous>, transform_indices = @transform_4, window_bounds = array<i64: 8, 256>}, {transform_indices = @transform_5, window_bounds = array<i64: 8, 128>}]} {
    %c0 = arith.constant 0 : index
    %c0_0 = arith.constant 0 : index
    %0 = vector.load %arg5[%c0, %c0_0] : memref<8x256xf32, #tpu.memory_space<vmem>>, vector<8x256xf32>
    %1 = vector.extract_strided_slice %0 {offsets = [0, 0], sizes = [1, 256], strides = [1, 1]} : vector<8x256xf32> to vector<1x256xf32>
    %2 = vector.extract_strided_slice %0 {offsets = [1, 0], sizes = [1, 256], strides = [1, 1]} : vector<8x256xf32> to vector<1x256xf32>
    %3 = vector.extract_strided_slice %0 {offsets = [2, 0], sizes = [1, 128], strides = [1, 1]} : vector<8x256xf32> to vector<1x128xf32>
    %4 = vector.extract_strided_slice %0 {offsets = [3, 0], sizes = [1, 128], strides = [1, 1]} : vector<8x256xf32> to vector<1x128xf32>
    %c0_1 = arith.constant 0 : index
    %c0_2 = arith.constant 0 : index
    %5 = vector.load %arg1[%c0_1, %c0_2] : memref<8x16xf32, #tpu.memory_space<vmem>>, vector<8x16xf32>
    %6 = arith.truncf %5 : vector<8x16xf32> to vector<8x16xbf16>
    %c0_3 = arith.constant 0 : index
    %c0_4 = arith.constant 0 : index
    %7 = vector.load %arg2[%c0_3, %c0_4] : memref<16x256xbf16, #tpu.memory_space<vmem>>, vector<16x256xbf16>
    %cst = arith.constant dense<0.000000e+00> : vector<8x256xf32>
    %8 = tpu.matmul %6, %7, %cst {dimension_numbers = #tpu.dot_dimension_numbers<[1], [0], [0], [1], [0, 0, 1, 1], [], []>} : vector<8x16xbf16>, vector<16x256xbf16>, vector<8x256xf32> -> vector<8x256xf32>
    %9 = vector.broadcast %1 : vector<1x256xf32> to vector<8x256xf32>
    %10 = arith.addf %8, %9 : vector<8x256xf32>
    %cst_5 = arith.constant 0.000000e+00 : f32
    %11 = vector.broadcast %cst_5 : f32 to vector<8x256xf32>
    %12 = arith.maximumf %10, %11 : vector<8x256xf32>
    %13 = arith.truncf %12 : vector<8x256xf32> to vector<8x256xbf16>
    %c0_6 = arith.constant 0 : index
    %c0_7 = arith.constant 0 : index
    %14 = vector.load %arg3[%c0_6, %c0_7] : memref<256x256xbf16, #tpu.memory_space<vmem>>, vector<256x256xbf16>
    %cst_8 = arith.constant dense<0.000000e+00> : vector<8x256xf32>
    %15 = tpu.matmul %13, %14, %cst_8 {dimension_numbers = #tpu.dot_dimension_numbers<[1], [0], [0], [1], [0, 0, 1, 1], [], []>} : vector<8x256xbf16>, vector<256x256xbf16>, vector<8x256xf32> -> vector<8x256xf32>
    %16 = vector.broadcast %2 : vector<1x256xf32> to vector<8x256xf32>
    %17 = arith.addf %15, %16 : vector<8x256xf32>
    %cst_9 = arith.constant 0.000000e+00 : f32
    %18 = vector.broadcast %cst_9 : f32 to vector<8x256xf32>
    %19 = arith.maximumf %17, %18 : vector<8x256xf32>
    %20 = arith.truncf %19 : vector<8x256xf32> to vector<8x256xbf16>
    %c0_10 = arith.constant 0 : index
    %c0_11 = arith.constant 0 : index
    %21 = vector.load %arg4[%c0_10, %c0_11] : memref<256x128xbf16, #tpu.memory_space<vmem>>, vector<256x128xbf16>
    %cst_12 = arith.constant dense<0.000000e+00> : vector<8x128xf32>
    %22 = tpu.matmul %20, %21, %cst_12 {dimension_numbers = #tpu.dot_dimension_numbers<[1], [0], [0], [1], [0, 0, 1, 1], [], []>} : vector<8x256xbf16>, vector<256x128xbf16>, vector<8x128xf32> -> vector<8x128xf32>
    %23 = vector.broadcast %3 : vector<1x128xf32> to vector<8x128xf32>
    %24 = arith.addf %22, %23 : vector<8x128xf32>
    %cst_13 = arith.constant 0.000000e+00 : f32
    %25 = vector.broadcast %cst_13 : f32 to vector<1x128xf32>
    %26 = arith.cmpf one, %4, %25 : vector<1x128xf32>
    %cst_14 = arith.constant 9.99999997E-7 : f32
    %cst_15 = arith.constant 1.000000e+00 : f32
    %27 = vector.broadcast %cst_14 : f32 to vector<8x128xf32>
    %28 = arith.maximumf %27, %24 : vector<8x128xf32>
    %29 = vector.broadcast %cst_15 : f32 to vector<8x128xf32>
    %30 = arith.minimumf %29, %28 : vector<8x128xf32>
    %31 = vector.shape_cast %26 : vector<1x128xi1> to vector<1x128xi1>
    %32 = vector.broadcast %31 : vector<1x128xi1> to vector<8x128xi1>
    %33 = arith.select %32, %30, %24 : vector<8x128xi1>, vector<8x128xf32>
    %c0_16 = arith.constant 0 : index
    %c0_17 = arith.constant 0 : index
    %34 = vector.load %arg6[%c0_16, %c0_17] : memref<8x128xf32, #tpu.memory_space<vmem>>, vector<8x128xf32>
    tpu.vector_store %arg6[%c0_16, %c0_17], %33 {strides = array<i32>} : memref<8x128xf32, #tpu.memory_space<vmem>>, vector<8x128xf32>,
    return
  }
  func.func @transform_0(%arg0: i32) -> (i32, i32) {
    %c0_i32 = arith.constant 0 : i32
    %c0_i32_0 = arith.constant 0 : i32
    return %arg0, %c0_i32 : i32, i32
  }
  func.func @transform_1(%arg0: i32) -> (i32, i32) {
    %c0_i32 = arith.constant 0 : i32
    %c0_i32_0 = arith.constant 0 : i32
    %c0_i32_1 = arith.constant 0 : i32
    return %c0_i32, %c0_i32_0 : i32, i32
  }
  func.func @transform_2(%arg0: i32) -> (i32, i32) {
    %c0_i32 = arith.constant 0 : i32
    %c0_i32_0 = arith.constant 0 : i32
    %c0_i32_1 = arith.constant 0 : i32
    return %c0_i32, %c0_i32_0 : i32, i32
  }
  func.func @transform_3(%arg0: i32) -> (i32, i32) {
    %c0_i32 = arith.constant 0 : i32
    %c0_i32_0 = arith.constant 0 : i32
    %c0_i32_1 = arith.constant 0 : i32
    return %c0_i32, %c0_i32_0 : i32, i32
  }
  func.func @transform_4(%arg0: i32) -> (i32, i32) {
    %c0_i32 = arith.constant 0 : i32
    %c0_i32_0 = arith.constant 0 : i32
    %c0_i32_1 = arith.constant 0 : i32
    return %c0_i32, %c0_i32_0 : i32, i32
  }
  func.func @transform_5(%arg0: i32) -> (i32, i32) {
    %c0_i32 = arith.constant 0 : i32
    %c0_i32_0 = arith.constant 0 : i32
    return %arg0, %c0_i32 : i32, i32
  }
}

</mosaic_0001>

<llo_original>
// kernel: tpu_custom_call.1
$region0: #{tpu_custom_call.1}
  #allocation0 [shape = 'u32[]', space=smem, size = 0x4, offset = 0x4, fixed_abs, tag = 'smem constant byte address 0x4 - core index']
  #allocation1 [shape = 'u32[144,128]{1,0:T(1,128)}', space=vmem, size = 0x12000, scoped, tag = 'internal scratch']
  %s0 = inlined_call_operand.hbm [shape: f32[8,16], index: 0, kind: input, shape index: {}]
  %s1 = inlined_call_operand.hbm [shape: bf16[16,256], index: 1, kind: input, shape index: {}]
  %s2 = inlined_call_operand.hbm [shape: bf16[256,256], index: 2, kind: input, shape index: {}]
  %s3 = inlined_call_operand.hbm [shape: bf16[256,128], index: 3, kind: input, shape index: {}]
  %s4 = inlined_call_operand.hbm [shape: f32[8,256], index: 4, kind: input, shape index: {}]
  %s5 = inlined_call_operand.hbm [shape: f32[8,128], index: 5, kind: output, shape index: {}]
  %s6 = sld [smem:[#allocation0]]
  $region50: #{tpu_custom_call.1} parent=0
    _
  %s8 = ssub.s32 1, %s6
  %s9 = scalar_select 0, %s8, %s6
  $region1: #{tpu_custom_call.1} parent=0
    #allocation2 [shape = 'u8[4096]{0}', space=vmem, size = 0x1000, scoped, tag = 'input window, operand 0, single buffered']
    #allocation3 [shape = 's32[1]{0}', space=sflag, size = 0x4, scoped, tag = 'scoped memory for tpu_custom_call.1']
    #allocation4 [shape = 's32[1]{0}', space=sflag, size = 0x4, scoped, tag = 'scoped memory for tpu_custom_call.1']
    #allocation5 [shape = 'u8[8192]{0}', space=vmem, size = 0x2000, scoped, tag = 'input window, operand 1, single buffered']
    #allocation6 [shape = 's32[1]{0}', space=sflag, size = 0x4, scoped, tag = 'scoped memory for tpu_custom_call.1']
    #allocation7 [shape = 'u8[131072]{0}', space=vmem, size = 0x20000, scoped, tag = 'input window, operand 2, single buffered']
    #allocation8 [shape = 'u8[65536]{0}', space=vmem, size = 0x10000, scoped, tag = 'input window, operand 3, single buffered']
    #allocation9 [shape = 's32[1]{0}', space=sflag, size = 0x4, scoped, tag = 'scoped memory for tpu_custom_call.1']
    #allocation10 [shape = 'u8[8192]{0}', space=vmem, size = 0x2000, scoped, tag = 'input window, operand 4, single buffered']
    #allocation11 [shape = 'u8[4096]{0}', space=vmem, size = 0x1000, scoped, tag = 'output window, operand 0, single buffered']
    %10 = vsyncpa [#allocation3], 0
    %11 = vsyncpa [#allocation6], 0
    %12 = vsyncpa [#allocation9], 0
    %13 = vsyncpa [#allocation4], 0
    // Predicated region
    $region2: #{tpu_custom_call.1} parent=1 // pred_check
      _
    $region3: #{tpu_custom_call.1} parent=1 // pred_check_branch
      %15 = sbr.rel (0) target = $region5
    $region4: #{tpu_custom_call.1} parent=1 // pred_region
      %s17 = ssub.s32 128, 128
      %18 = vsyncadd [#allocation3], %s17
      %s20 = sshll.u32 [#allocation2], 4
      %s21 = int_to_ptr.vmem [resolvable:$true] %s20
      %23 = dma.hbm_to_vmem [thread:$0]  %s0, 128, %s21, [#allocation3]
    $region5: #{tpu_custom_call.1} parent=1 // pred_fallthru
      _
    // Predicated region
    $region6: #{tpu_custom_call.1} parent=1 // pred_check
      _
    $region7: #{tpu_custom_call.1} parent=1 // pred_check_branch
      %25 = sbr.rel (0) target = $region9
    $region8: #{tpu_custom_call.1} parent=1 // pred_region
      %s27 = ssub.s32 256, 256
      %28 = vsyncadd [#allocation6], %s27
      %s29 = sshll.u32 [#allocation5], 4
      %s30 = int_to_ptr.vmem [resolvable:$true] %s29
      %35 = dma.hbm_to_vmem [thread:$0]  %s1, 256, %s30, [#allocation6], 128, 128, 8
    $region9: #{tpu_custom_call.1} parent=1 // pred_fallthru
      _
    // Predicated region
    $region10: #{tpu_custom_call.1} parent=1 // pred_check
      _
    $region11: #{tpu_custom_call.1} parent=1 // pred_check_branch
      %37 = sbr.rel (0) target = $region13
    $region12: #{tpu_custom_call.1} parent=1 // pred_region
      %s39 = ssub.s32 4096, 4096
      %40 = vsyncadd [#allocation6], %s39
      %s41 = sshll.u32 [#allocation7], 4
      %s42 = int_to_ptr.vmem [resolvable:$true] %s41
      %47 = dma.hbm_to_vmem [thread:$0]  %s2, 4096, %s42, [#allocation6], 128, 128, 8
    $region13: #{tpu_custom_call.1} parent=1 // pred_fallthru
      _
    // Predicated region
    $region14: #{tpu_custom_call.1} parent=1 // pred_check
      _
    $region15: #{tpu_custom_call.1} parent=1 // pred_check_branch
      %49 = sbr.rel (0) target = $region17
    $region16: #{tpu_custom_call.1} parent=1 // pred_region
      %s51 = ssub.s32 2048, 2048
      %52 = vsyncadd [#allocation9], %s51
      %s53 = sshll.u32 [#allocation8], 4
      %s54 = int_to_ptr.vmem [resolvable:$true] %s53
      %59 = dma.hbm_to_vmem [thread:$0]  %s3, 2048, %s54, [#allocation9], 64, 64, 4
    $region17: #{tpu_custom_call.1} parent=1 // pred_fallthru
      _
    // Predicated region
    $region18: #{tpu_custom_call.1} parent=1 // pred_check
      _
    $region19: #{tpu_custom_call.1} parent=1 // pred_check_branch
      %61 = sbr.rel (0) target = $region21
    $region20: #{tpu_custom_call.1} parent=1 // pred_region
      %s63 = ssub.s32 256, 256
      %64 = vsyncadd [#allocation9], %s63
      %s66 = sshll.u32 [#allocation10], 4
      %s67 = int_to_ptr.vmem [resolvable:$true] %s66
      %69 = dma.hbm_to_vmem [thread:$0]  %s4, 256, %s67, [#allocation9]
    $region21: #{tpu_custom_call.1} parent=1 // pred_fallthru
      _
    // Predicated region
    $region22: #{tpu_custom_call.1} parent=1 // pred_check
      _
    $region23: #{tpu_custom_call.1} parent=1 // pred_check_branch
      %71 = sbr.rel (0) target = $region25
    $region24: #{tpu_custom_call.1} parent=1 // pred_region
      %72 = dma.done [#allocation3], 128
    $region25: #{tpu_custom_call.1} parent=1 // pred_fallthru
      _
    // Predicated region
    $region26: #{tpu_custom_call.1} parent=1 // pred_check
      _
    $region27: #{tpu_custom_call.1} parent=1 // pred_check_branch
      %74 = sbr.rel (0) target = $region29
    $region28: #{tpu_custom_call.1} parent=1 // pred_region
      %75 = dma.done [#allocation6], 256
    $region29: #{tpu_custom_call.1} parent=1 // pred_fallthru
      _
    // Predicated region
    $region30: #{tpu_custom_call.1} parent=1 // pred_check
      _
    $region31: #{tpu_custom_call.1} parent=1 // pred_check_branch
      %77 = sbr.rel (0) target = $region33
    $region32: #{tpu_custom_call.1} parent=1 // pred_region
      %78 = dma.done [#allocation6], 4096
    $region33: #{tpu_custom_call.1} parent=1 // pred_fallthru
      _
    // Predicated region
    $region34: #{tpu_custom_call.1} parent=1 // pred_check
      _
    $region35: #{tpu_custom_call.1} parent=1 // pred_check_branch
      %80 = sbr.rel (0) target = $region37
    $region36: #{tpu_custom_call.1} parent=1 // pred_region
      %81 = dma.done [#allocation9], 2048
    $region37: #{tpu_custom_call.1} parent=1 // pred_fallthru
      _
    // Predicated region
    $region38: #{tpu_custom_call.1} parent=1 // pred_check
      _
    $region39: #{tpu_custom_call.1} parent=1 // pred_check_branch
      %83 = sbr.rel (0) target = $region41
    $region40: #{tpu_custom_call.1} parent=1 // pred_region
      %84 = dma.done [#allocation9], 256
    $region41: #{tpu_custom_call.1} parent=1 // pred_fallthru
      _
    %v86 = vld [vmem:[#allocation10] sm:$0xff]
    %v87 = vld [vmem:[#allocation10 + $0x8] sm:$0xff]
    %v88 = vld [vmem:[#allocation2] sm:$0xff]
    %v89 = vpack.c.bf16 %v88, %v88
    %v90 = vld [vmem:[#allocation5] sm:$0xff]
    %v91 = vld [vmem:[#allocation5 + $0x8] sm:$0xff]
    %v92 = vlaneseq
    %v93 = vshrl.u32 %v92, 7
    %v94 = vsub.s32 0, %v93
    %v95 = vrot.slane %v86, %v94
    %v96 = vlaneseq
    %v97 = vshrl.u32 %v96, 7
    %v98 = vsub.s32 0, %v97
    %v99 = vrot.slane %v87, %v98
    %v102 = vunpack.c.l.b16 %v90
    %v103 = vunpack.c.h.b16 %v90
    %v104 = vunpack.c.l.b16 %v91
    %v105 = vunpack.c.h.b16 %v91
    %v106 = vpack.c.b16 %v104, %v102
    %v107 = vpack.c.b16 %v105, %v103
    %vm110 = vcmask 130048
    %v112 = vsel %vm110, %v89, 0
    %114 = vmatprep.subr.bf16.mxu0 %v107
    %115 = vmatpush1.bf16.msra.mxu0 %v106
    %116 = vmatprep.subr.bf16.mxu0 0
    %117 = vmatpush1.bf16.msra.mxu0 0
    %118 = vmatprep.subr.bf16.mxu0 0
    %119 = vmatpush1.bf16.msra.mxu0 0
    %120 = vmatprep.subr.bf16.mxu0 0
    %121 = vmatpush1.bf16.msra.mxu0 0
    %122 = vmatprep.subr.bf16.mxu0 0
    %123 = vmatpush1.bf16.msra.mxu0 0
    %124 = vmatprep.subr.bf16.mxu0 0
    %125 = vmatpush1.bf16.msra.mxu0 0
    %126 = vmatprep.subr.bf16.mxu0 0
    %127 = vmatpush1.bf16.msra.mxu0 0
    %128 = vmatprep.subr.bf16.mxu0 0
    %129 = vmatpush1.bf16.msra.mxu0 0
    %130 = vmatprep.subr.bf16.mxu0 0
    %131 = vmatpush1.bf16.msra.mxu0 0
    %132 = vmatprep.subr.bf16.mxu0 0
    %133 = vmatpush1.bf16.msra.mxu0 0
    %134 = vmatprep.subr.bf16.mxu0 0
    %135 = vmatpush1.bf16.msra.mxu0 0
    %136 = vmatprep.subr.bf16.mxu0 0
    %137 = vmatpush1.bf16.msra.mxu0 0
    %138 = vmatprep.subr.bf16.mxu0 0
    %139 = vmatpush1.bf16.msra.mxu0 0
    %140 = vmatprep.subr.bf16.mxu0 0
    %141 = vmatpush1.bf16.msra.mxu0 0
    %142 = vmatprep.subr.bf16.mxu0 0
    %143 = vmatpush1.bf16.msra.mxu0 0
    %144 = vmatprep.subr.bf16.mxu0 0
    %145 = vmatpush1.bf16.msra.mxu0 0
    %146 = vmatprep.mubr.bf16.mxu0 0
    %147 = vmatmul.mubr.bf16.gmra.mrb[0].mxu0 %v112
    %v148 = vpop.f32.mrb[0].mxu0
    %v149 = vadd.f32 %v95, %v148
    %v150 = vpop.f32.mrb[0].mxu0
    %v151 = vadd.f32 %v99, %v150
    %v152 = vpop.f32.mrb[0].mxu0
    %v153 = vpop.f32.mrb[0].mxu0
    %154 = vdwg.mxu0
    %v155 = vmax.f32 %v149, 0.0
    %v156 = vmax.f32 %v151, 0.0
    %v157 = vpack.c.bf16 %v155, %v155
    %v158 = vpack.c.bf16 %v156, %v156
    %v159 = vld [vmem:[#allocation7] sm:$0xff]
    %v160 = vld [vmem:[#allocation7 + $0x8] sm:$0xff]
    %v161 = vld [vmem:[#allocation7 + $0x10] sm:$0xff]
    %v162 = vld [vmem:[#allocation7 + $0x18] sm:$0xff]
    %v163 = vld [vmem:[#allocation7 + $0x20] sm:$0xff]
    %v164 = vld [vmem:[#allocation7 + $0x28] sm:$0xff]
    %v165 = vld [vmem:[#allocation7 + $0x30] sm:$0xff]
    %v166 = vld [vmem:[#allocation7 + $0x38] sm:$0xff]
    %v167 = vld [vmem:[#allocation7 + $0x40] sm:$0xff]
    %v168 = vld [vmem:[#allocation7 + $0x48] sm:$0xff]
    %v169 = vld [vmem:[#allocation7 + $0x50] sm:$0xff]
    %v170 = vld [vmem:[#allocation7 + $0x58] sm:$0xff]
    %v171 = vld [vmem:[#allocation7 + $0x60] sm:$0xff]
    %v172 = vld [vmem:[#allocation7 + $0x68] sm:$0xff]
    %v173 = vld [vmem:[#allocation7 + $0x70] sm:$0xff]
    %v174 = vld [vmem:[#allocation7 + $0x78] sm:$0xff]
    %v175 = vld [vmem:[#allocation7 + $0x80] sm:$0xff]
    %v176 = vld [vmem:[#allocation7 + $0x88] sm:$0xff]
    %v177 = vld [vmem:[#allocation7 + $0x90] sm:$0xff]
    %v178 = vld [vmem:[#allocation7 + $0x98] sm:$0xff]
    %v179 = vld [vmem:[#allocation7 + $0xa0] sm:$0xff]
    %v180 = vld [vmem:[#allocation7 + $0xa8] sm:$0xff]
    %v181 = vld [vmem:[#allocation7 + $0xb0] sm:$0xff]
    %v182 = vld [vmem:[#allocation7 + $0xb8] sm:$0xff]
    %v183 = vld [vmem:[#allocation7 + $0xc0] sm:$0xff]
    %v184 = vld [vmem:[#allocation7 + $0xc8] sm:$0xff]
    %v185 = vld [vmem:[#allocation7 + $0xd0] sm:$0xff]
    %v186 = vld [vmem:[#allocation7 + $0xd8] sm:$0xff]
    %v187 = vld [vmem:[#allocation7 + $0xe0] sm:$0xff]
    %v188 = vld [vmem:[#allocation7 + $0xe8] sm:$0xff]
    %v189 = vld [vmem:[#allocation7 + $0xf0] sm:$0xff]
    %v190 = vld [vmem:[#allocation7 + $0xf8] sm:$0xff]
    %v191 = vlaneseq
    %v192 = vshrl.u32 %v191, 7
    %v193 = vsub.s32 1, %v192
    %v194 = vrot.slane %v86, %v193
    %v195 = vlaneseq
    %v196 = vshrl.u32 %v195, 7
    %v197 = vsub.s32 1, %v196
    %v198 = vrot.slane %v87, %v197
    %v231 = vunpack.c.l.b16 %v159
    %v232 = vunpack.c.h.b16 %v159
    %v233 = vunpack.c.l.b16 %v160
    %v234 = vunpack.c.h.b16 %v160
    %v235 = vunpack.c.l.b16 %v161
    %v236 = vunpack.c.h.b16 %v161
    %v237 = vunpack.c.l.b16 %v162
    %v238 = vunpack.c.h.b16 %v162
    %v239 = vunpack.c.l.b16 %v163
    %v240 = vunpack.c.h.b16 %v163
    %v241 = vunpack.c.l.b16 %v164
    %v242 = vunpack.c.h.b16 %v164
    %v243 = vunpack.c.l.b16 %v165
    %v244 = vunpack.c.h.b16 %v165
    %v245 = vunpack.c.l.b16 %v166
    %v246 = vunpack.c.h.b16 %v166
    %v247 = vunpack.c.l.b16 %v167
    %v248 = vunpack.c.h.b16 %v167
    %v249 = vunpack.c.l.b16 %v168
    %v250 = vunpack.c.h.b16 %v168
    %v251 = vunpack.c.l.b16 %v169
    %v252 = vunpack.c.h.b16 %v169
    %v253 = vunpack.c.l.b16 %v170
    %v254 = vunpack.c.h.b16 %v170
    %v255 = vunpack.c.l.b16 %v171
    %v256 = vunpack.c.h.b16 %v171
    %v257 = vunpack.c.l.b16 %v172
    %v258 = vunpack.c.h.b16 %v172
    %v259 = vunpack.c.l.b16 %v173
    %v260 = vunpack.c.h.b16 %v173
    %v261 = vunpack.c.l.b16 %v174
    %v262 = vunpack.c.h.b16 %v174
    %v263 = vunpack.c.l.b16 %v175
    %v264 = vunpack.c.h.b16 %v175
    %v265 = vunpack.c.l.b16 %v176
    %v266 = vunpack.c.h.b16 %v176
    %v267 = vunpack.c.l.b16 %v177
    %v268 = vunpack.c.h.b16 %v177
    %v269 = vunpack.c.l.b16 %v178
    %v270 = vunpack.c.h.b16 %v178
    %v271 = vunpack.c.l.b16 %v179
    %v272 = vunpack.c.h.b16 %v179
    %v273 = vunpack.c.l.b16 %v180
    %v274 = vunpack.c.h.b16 %v180
    %v275 = vunpack.c.l.b16 %v181
    %v276 = vunpack.c.h.b16 %v181
    %v277 = vunpack.c.l.b16 %v182
    %v278 = vunpack.c.h.b16 %v182
    %v279 = vunpack.c.l.b16 %v183
    %v280 = vunpack.c.h.b16 %v183
    %v281 = vunpack.c.l.b16 %v184
    %v282 = vunpack.c.h.b16 %v184
    %v283 = vunpack.c.l.b16 %v185
    %v284 = vunpack.c.h.b16 %v185
    %v285 = vunpack.c.l.b16 %v186
    %v286 = vunpack.c.h.b16 %v186
    %v287 = vunpack.c.l.b16 %v187
    %v288 = vunpack.c.h.b16 %v187
    %v289 = vunpack.c.l.b16 %v188
    %v290 = vunpack.c.h.b16 %v188
    %v291 = vunpack.c.l.b16 %v189
    %v292 = vunpack.c.h.b16 %v189
    %v293 = vunpack.c.l.b16 %v190
    %v294 = vunpack.c.h.b16 %v190
    %v295 = vpack.c.b16 %v233, %v231
    %v296 = vpack.c.b16 %v234, %v232
    %v297 = vpack.c.b16 %v237, %v235
    %v298 = vpack.c.b16 %v238, %v236
    %v299 = vpack.c.b16 %v241, %v239
    %v300 = vpack.c.b16 %v242, %v240
    %v301 = vpack.c.b16 %v245, %v243
    %v302 = vpack.c.b16 %v246, %v244
    %v303 = vpack.c.b16 %v249, %v247
    %v304 = vpack.c.b16 %v250, %v248
    %v305 = vpack.c.b16 %v253, %v251
    %v306 = vpack.c.b16 %v254, %v252
    %v307 = vpack.c.b16 %v257, %v255
    %v308 = vpack.c.b16 %v258, %v256
    %v309 = vpack.c.b16 %v261, %v259
    %v310 = vpack.c.b16 %v262, %v260
    %v311 = vpack.c.b16 %v265, %v263
    %v312 = vpack.c.b16 %v266, %v264
    %v313 = vpack.c.b16 %v269, %v267
    %v314 = vpack.c.b16 %v270, %v268
    %v315 = vpack.c.b16 %v273, %v271
    %v316 = vpack.c.b16 %v274, %v272
    %v317 = vpack.c.b16 %v277, %v275
    %v318 = vpack.c.b16 %v278, %v276
    %v319 = vpack.c.b16 %v281, %v279
    %v320 = vpack.c.b16 %v282, %v280
    %v321 = vpack.c.b16 %v285, %v283
    %v322 = vpack.c.b16 %v286, %v284
    %v323 = vpack.c.b16 %v289, %v287
    %v324 = vpack.c.b16 %v290, %v288
    %v325 = vpack.c.b16 %v293, %v291
    %v326 = vpack.c.b16 %v294, %v292
    %359 = vmatprep.subr.bf16.mxu0 %v296
    %360 = vmatpush1.bf16.msra.mxu0 %v295
    %361 = vmatprep.subr.bf16.mxu0 %v298
    %362 = vmatpush1.bf16.msra.mxu0 %v297
    %363 = vmatprep.subr.bf16.mxu0 %v300
    %364 = vmatpush1.bf16.msra.mxu0 %v299
    %365 = vmatprep.subr.bf16.mxu0 %v302
    %366 = vmatpush1.bf16.msra.mxu0 %v301
    %367 = vmatprep.subr.bf16.mxu0 %v304
    %368 = vmatpush1.bf16.msra.mxu0 %v303
    %369 = vmatprep.subr.bf16.mxu0 %v306
    %370 = vmatpush1.bf16.msra.mxu0 %v305
    %371 = vmatprep.subr.bf16.mxu0 %v308
    %372 = vmatpush1.bf16.msra.mxu0 %v307
    %373 = vmatprep.subr.bf16.mxu0 %v310
    %374 = vmatpush1.bf16.msra.mxu0 %v309
    %375 = vmatprep.subr.bf16.mxu0 %v312
    %376 = vmatpush1.bf16.msra.mxu0 %v311
    %377 = vmatprep.subr.bf16.mxu0 %v314
    %378 = vmatpush1.bf16.msra.mxu0 %v313
    %379 = vmatprep.subr.bf16.mxu0 %v316
    %380 = vmatpush1.bf16.msra.mxu0 %v315
    %381 = vmatprep.subr.bf16.mxu0 %v318
    %382 = vmatpush1.bf16.msra.mxu0 %v317
    %383 = vmatprep.subr.bf16.mxu0 %v320
    %384 = vmatpush1.bf16.msra.mxu0 %v319
    %385 = vmatprep.subr.bf16.mxu0 %v322
    %386 = vmatpush1.bf16.msra.mxu0 %v321
    %387 = vmatprep.subr.bf16.mxu0 %v324
    %388 = vmatpush1.bf16.msra.mxu0 %v323
    %389 = vmatprep.subr.bf16.mxu0 %v326
    %390 = vmatpush1.bf16.msra.mxu0 %v325
    %391 = vmatprep.mubr.bf16.mxu0 %v158
    %392 = vmatmul.mubr.bf16.gmra.mrb[0].mxu0 %v157
    %v393 = vpop.f32.mrb[0].mxu0
    %v394 = vadd.f32 %v194, %v393
    %v395 = vpop.f32.mrb[0].mxu0
    %v396 = vadd.f32 %v198, %v395
    %v397 = vpop.f32.mrb[0].mxu0
    %v398 = vpop.f32.mrb[0].mxu0
    %399 = vdwg.mxu0
    %v400 = vmax.f32 %v394, 0.0
    %v401 = vmax.f32 %v396, 0.0
    %v402 = vpack.c.bf16 %v400, %v400
    %v403 = vpack.c.bf16 %v401, %v401
    %v404 = vld [vmem:[#allocation8] sm:$0xf]
    %v405 = vld [vmem:[#allocation8 + $0x4] sm:$0xf]
    %v406 = vld [vmem:[#allocation8 + $0x8] sm:$0xf]
    %v407 = vld [vmem:[#allocation8 + $0xc] sm:$0xf]
    %v408 = vld [vmem:[#allocation8 + $0x10] sm:$0xf]
    %v409 = vld [vmem:[#allocation8 + $0x14] sm:$0xf]
    %v410 = vld [vmem:[#allocation8 + $0x18] sm:$0xf]
    %v411 = vld [vmem:[#allocation8 + $0x1c] sm:$0xf]
    %v412 = vld [vmem:[#allocation8 + $0x20] sm:$0xf]
    %v413 = vld [vmem:[#allocation8 + $0x24] sm:$0xf]
    %v414 = vld [vmem:[#allocation8 + $0x28] sm:$0xf]
    %v415 = vld [vmem:[#allocation8 + $0x2c] sm:$0xf]
    %v416 = vld [vmem:[#allocation8 + $0x30] sm:$0xf]
    %v417 = vld [vmem:[#allocation8 + $0x34] sm:$0xf]
    %v418 = vld [vmem:[#allocation8 + $0x38] sm:$0xf]
    %v419 = vld [vmem:[#allocation8 + $0x3c] sm:$0xf]
    %v420 = vld [vmem:[#allocation8 + $0x40] sm:$0xf]
    %v421 = vld [vmem:[#allocation8 + $0x44] sm:$0xf]
    %v422 = vld [vmem:[#allocation8 + $0x48] sm:$0xf]
    %v423 = vld [vmem:[#allocation8 + $0x4c] sm:$0xf]
    %v424 = vld [vmem:[#allocation8 + $0x50] sm:$0xf]
    %v425 = vld [vmem:[#allocation8 + $0x54] sm:$0xf]
    %v426 = vld [vmem:[#allocation8 + $0x58] sm:$0xf]
    %v427 = vld [vmem:[#allocation8 + $0x5c] sm:$0xf]
    %v428 = vld [vmem:[#allocation8 + $0x60] sm:$0xf]
    %v429 = vld [vmem:[#allocation8 + $0x64] sm:$0xf]
    %v430 = vld [vmem:[#allocation8 + $0x68] sm:$0xf]
    %v431 = vld [vmem:[#allocation8 + $0x6c] sm:$0xf]
    %v432 = vld [vmem:[#allocation8 + $0x70] sm:$0xf]
    %v433 = vld [vmem:[#allocation8 + $0x74] sm:$0xf]
    %v434 = vld [vmem:[#allocation8 + $0x78] sm:$0xf]
    %v435 = vld [vmem:[#allocation8 + $0x7c] sm:$0xf]
    %v436 = vlaneseq
    %v437 = vshrl.u32 %v436, 7
    %v438 = vsub.s32 2, %v437
    %v439 = vrot.slane %v86, %v438
    %v472 = vunpack.c.l.b16 %v404
    %v473 = vunpack.c.l.b16 %v405
    %v474 = vunpack.c.l.b16 %v406
    %v475 = vunpack.c.l.b16 %v407
    %v476 = vunpack.c.l.b16 %v408
    %v477 = vunpack.c.l.b16 %v409
    %v478 = vunpack.c.l.b16 %v410
    %v479 = vunpack.c.l.b16 %v411
    %v480 = vunpack.c.l.b16 %v412
    %v481 = vunpack.c.l.b16 %v413
    %v482 = vunpack.c.l.b16 %v414
    %v483 = vunpack.c.l.b16 %v415
    %v484 = vunpack.c.l.b16 %v416
    %v485 = vunpack.c.l.b16 %v417
    %v486 = vunpack.c.l.b16 %v418
    %v487 = vunpack.c.l.b16 %v419
    %v488 = vunpack.c.l.b16 %v420
    %v489 = vunpack.c.l.b16 %v421
    %v490 = vunpack.c.l.b16 %v422
    %v491 = vunpack.c.l.b16 %v423
    %v492 = vunpack.c.l.b16 %v424
    %v493 = vunpack.c.l.b16 %v425
    %v494 = vunpack.c.l.b16 %v426
    %v495 = vunpack.c.l.b16 %v427
    %v496 = vunpack.c.l.b16 %v428
    %v497 = vunpack.c.l.b16 %v429
    %v498 = vunpack.c.l.b16 %v430
    %v499 = vunpack.c.l.b16 %v431
    %v500 = vunpack.c.l.b16 %v432
    %v501 = vunpack.c.l.b16 %v433
    %v502 = vunpack.c.l.b16 %v434
    %v503 = vunpack.c.l.b16 %v435
    %v504 = vpack.c.b16 %v473, %v472
    %v505 = vpack.c.b16 %v475, %v474
    %v506 = vpack.c.b16 %v477, %v476
    %v507 = vpack.c.b16 %v479, %v478
    %v508 = vpack.c.b16 %v481, %v480
    %v509 = vpack.c.b16 %v483, %v482
    %v510 = vpack.c.b16 %v485, %v484
    %v511 = vpack.c.b16 %v487, %v486
    %v512 = vpack.c.b16 %v489, %v488
    %v513 = vpack.c.b16 %v491, %v490
    %v514 = vpack.c.b16 %v493, %v492
    %v515 = vpack.c.b16 %v495, %v494
    %v516 = vpack.c.b16 %v497, %v496
    %v517 = vpack.c.b16 %v499, %v498
    %v518 = vpack.c.b16 %v501, %v500
    %v519 = vpack.c.b16 %v503, %v502
    %536 = vmatprep.subr.bf16.mxu0 0
    %537 = vmatpush1.bf16.msra.mxu0 %v504
    %538 = vmatprep.subr.bf16.mxu0 0
    %539 = vmatpush1.bf16.msra.mxu0 %v505
    %540 = vmatprep.subr.bf16.mxu0 0
    %541 = vmatpush1.bf16.msra.mxu0 %v506
    %542 = vmatprep.subr.bf16.mxu0 0
    %543 = vmatpush1.bf16.msra.mxu0 %v507
    %544 = vmatprep.subr.bf16.mxu0 0
    %545 = vmatpush1.bf16.msra.mxu0 %v508
    %546 = vmatprep.subr.bf16.mxu0 0
    %547 = vmatpush1.bf16.msra.mxu0 %v509
    %548 = vmatprep.subr.bf16.mxu0 0
    %549 = vmatpush1.bf16.msra.mxu0 %v510
    %550 = vmatprep.subr.bf16.mxu0 0
    %551 = vmatpush1.bf16.msra.mxu0 %v511
    %552 = vmatprep.subr.bf16.mxu0 0
    %553 = vmatpush1.bf16.msra.mxu0 %v512
    %554 = vmatprep.subr.bf16.mxu0 0
    %555 = vmatpush1.bf16.msra.mxu0 %v513
    %556 = vmatprep.subr.bf16.mxu0 0
    %557 = vmatpush1.bf16.msra.mxu0 %v514
    %558 = vmatprep.subr.bf16.mxu0 0
    %559 = vmatpush1.bf16.msra.mxu0 %v515
    %560 = vmatprep.subr.bf16.mxu0 0
    %561 = vmatpush1.bf16.msra.mxu0 %v516
    %562 = vmatprep.subr.bf16.mxu0 0
    %563 = vmatpush1.bf16.msra.mxu0 %v517
    %564 = vmatprep.subr.bf16.mxu0 0
    %565 = vmatpush1.bf16.msra.mxu0 %v518
    %566 = vmatprep.subr.bf16.mxu0 0
    %567 = vmatpush1.bf16.msra.mxu0 %v519
    %568 = vmatprep.mubr.bf16.mxu0 %v403
    %569 = vmatmul.mubr.bf16.gmra.mrb[0].mxu0 %v402
    %v570 = vpop.f32.mrb[0].mxu0
    %v571 = vadd.f32 %v439, %v570
    %v572 = vpop.f32.mrb[0].mxu0
    %v573 = vpop.f32.mrb[0].mxu0
    %v574 = vpop.f32.mrb[0].mxu0
    %575 = vdwg.mxu0
    %vm576 = vcmp.ne.f32.partialorder %v86, 0.0
    %v577 = vmax.f32 %v571, 1e-06
    %v578 = vmin.f32 %v577, 1.0
    %v579 = vsel %vm576, 1, 0
    %v580 = vlaneseq
    %v581 = vshrl.u32 %v580, 7
    %v582 = vsub.s32 3, %v581
    %v583 = vrot.slane %v579, %v582
    %vm584 = vcmp.eq.s32.totalorder %v583, 1
    %v585 = vsel %vm584, %v578, %v571
    %586 = vst [vmem:[#allocation11] sm:$0xff] %v585
    // Predicated region
    $region42: #{tpu_custom_call.1} parent=1 // pred_check
      _
    $region43: #{tpu_custom_call.1} parent=1 // pred_check_branch
      %588 = sbr.rel (0) target = $region45
    $region44: #{tpu_custom_call.1} parent=1 // pred_region
      %s590 = ssub.s32 128, 128
      %591 = vsyncadd [#allocation4], %s590
      %s593 = sshll.u32 [#allocation11], 4
      %s594 = int_to_ptr.vmem [resolvable:$true] %s593
      %596 = dma.vmem_to_hbm [thread:$0]  %s594, 128, %s5, [#allocation4]
    $region45: #{tpu_custom_call.1} parent=1 // pred_fallthru
      _
    // Predicated region
    $region46: #{tpu_custom_call.1} parent=1 // pred_check
      _
    $region47: #{tpu_custom_call.1} parent=1 // pred_check_branch
      %598 = sbr.rel (0) target = $region49
    $region48: #{tpu_custom_call.1} parent=1 // pred_region
      %599 = dma.done [#allocation4], 128
    $region49: #{tpu_custom_call.1} parent=1 // pred_fallthru
      _
    %600 = vsyncpa [#allocation3], 1
    %601 = vsyncpa [#allocation6], 1
    %602 = vsyncpa [#allocation9], 1
    %603 = vsyncpa [#allocation4], 1

</llo_original>
